<compile_context>
chip_gen: v7x
topology: tpu7x:2x2x1
jax: 0.10.0
libtpu: 0.0.40
codegen_flags: <defaults>
</compile_context>

<pallas_src>
import functools

import jax
import jax.numpy as jnp
from jax import lax
from jax.experimental import pallas as pl
from jax.experimental.pallas import tpu as pltpu

LANE = 128          # lane width: the 4-wide logits are padded to a full vreg lane dim
NUM_ACTIONS = 4
HIDDEN = 64
IN_FEATURES = 231
MAX_TB = 1024       # batch-tile ceiling (safe on v5e 16 MiB scoped VMEM and v7x 64 MiB phys)


def _round_up(x, m):
    return (x + m - 1) // m * m


def mlp_tile_argmax_kernel(x_ref, w1_ref, b1_ref, w2_ref, b2_ref, w3_ref, b3_ref,
                           max_ref, idx_ref, max_sc, idx_sc, *, actual_b, num_actions):
    i = pl.program_id(0)
    tb = x_ref.shape[0]

    # --- fused MLP: bf16 MXU operands, f32 accumulation, f32 tanh -------------------
    x = x_ref[...].astype(jnp.bfloat16)                                    # (TB, 231)
    h1 = jnp.tanh(
        jnp.dot(x, w1_ref[...], preferred_element_type=jnp.float32) + b1_ref[...]
    )                                                                      # (TB, 64) f32
    h2 = jnp.tanh(
        jnp.dot(h1.astype(jnp.bfloat16), w2_ref[...],
                preferred_element_type=jnp.float32) + b2_ref[...]
    )                                                                      # (TB, 64) f32
    logits = (
        jnp.dot(h2.astype(jnp.bfloat16), w3_ref[...],
                preferred_element_type=jnp.float32) + b3_ref[...]
    )                                                                      # (TB, 128) f32

    # --- per-tile argmax --------------------------------------------------------------
    # Padded lanes (col >= num_actions) already lose via the -1e30 padded bias, so no
    # column mask.  Row validity is a single (TB,1) term (only the last tile has pad rows).
    local_rows = lax.broadcasted_iota(jnp.int32, (tb, 1), 0)
    row_valid = (local_rows + i * tb) < actual_b
    masked = jnp.where(row_valid, logits, jnp.float32(-3.0e38))            # (TB, 128)

    tile_max = jnp.max(masked, keepdims=True)                              # (1, 1)
    rows = lax.broadcasted_iota(jnp.int32, masked.shape, 0)
    cols = lax.broadcasted_iota(jnp.int32, masked.shape, 1)
    local_flat = rows * num_actions + cols                                 # tile-local flat id
    sentinel = jnp.int32(jnp.iinfo(jnp.int32).max)
    tile_idx = jnp.min(jnp.where(masked == tile_max, local_flat, sentinel),
                       keepdims=True)                                      # first occurrence

    # Stage (1,1) results through VMEM, then scalar-copy to the SMEM per-tile outputs.
    max_sc[...] = tile_max
    idx_sc[...] = tile_idx
    max_ref[0, 0] = max_sc[0, 0]
    idx_ref[0, 0] = idx_sc[0, 0] + i * tb * num_actions                    # global flat idx


@functools.partial(jax.jit, static_argnames=("num_actions",))
def net_forward(x, params, num_actions=NUM_ACTIONS):
    """x: (B, 231) (or any (B, ...) flattening to 231); returns scalar int32 argmax
    index over the flattened (B, 4) logits, matching `Net.forward`."""
    w1, b1, w2, b2, w3p, b3p = params
    x = x.reshape(x.shape[0], -1)          # nn.Flatten()
    B, F = x.shape

    # Batch tiling: up to 1024-row tiles; tiny batches use one sublane-aligned tile.
    TB = min(MAX_TB, _round_up(B, 8))
    padded_B = _round_up(B, TB)
    xp = x if padded_B == B else jnp.pad(x, ((0, padded_B - B), (0, 0)))
    num_tiles = padded_B // TB

    kernel = functools.partial(mlp_tile_argmax_kernel,
                               actual_b=B, num_actions=num_actions)

    tile_max, tile_idx = pl.pallas_call(
        kernel,
        out_shape=(jax.ShapeDtypeStruct((num_tiles, 1), jnp.float32),
                   jax.ShapeDtypeStruct((num_tiles, 1), jnp.int32)),
        grid_spec=pltpu.PrefetchScalarGridSpec(
            num_scalar_prefetch=0,
            grid=(num_tiles,),
            in_specs=[
                pl.BlockSpec((TB, F), lambda i: (i, 0)),      # activations, tiled over batch
                pl.BlockSpec(w1.shape, lambda i: (0, 0)),     # weights/biases: VMEM-resident
                pl.BlockSpec(b1.shape, lambda i: (0, 0)),
                pl.BlockSpec(w2.shape, lambda i: (0, 0)),
                pl.BlockSpec(b2.shape, lambda i: (0, 0)),
                pl.BlockSpec(w3p.shape, lambda i: (0, 0)),
                pl.BlockSpec(b3p.shape, lambda i: (0, 0)),
            ],
            out_specs=(
                pl.BlockSpec((1, 1), lambda i: (i, 0),
                             memory_space=pltpu.MemorySpace.SMEM),   # per-tile max logit
                pl.BlockSpec((1, 1), lambda i: (i, 0),
                             memory_space=pltpu.MemorySpace.SMEM),   # per-tile flat argmax
            ),
            scratch_shapes=[
                pltpu.VMEM((1, 1), jnp.float32),
                pltpu.VMEM((1, 1), jnp.int32),
            ],
        ),
        compiler_params=pltpu.CompilerParams(
            dimension_semantics=("parallel",),          # tiles are independent -> megacore OK
            vmem_limit_bytes=32 * 1024 * 1024,
        ),
    )(xp, w1, b1, w2, b2, w3p, b3p)

    # Tiny cross-tile combine (first-occurrence tie-break: jnp.argmax picks the earliest
    # tile, whose winning flat index is the smallest among tying tiles).
    best_tile = jnp.argmax(tile_max[:, 0])
    return tile_idx[best_tile, 0]


def init_params(key):
    """Deterministic init mimicking nn.Linear. Weights stored (in, out) bf16 for the MXU.
    The final layer is pre-padded to 128 output lanes; the -1e30 padded bias is
    load-bearing (no column mask in the kernel)."""
    ks = jax.random.split(key, 6)

    def linear(kw, kb, fan_in, fan_out):
        bound = float(fan_in) ** -0.5
        w = jax.random.uniform(kw, (fan_in, fan_out), jnp.float32, -bound, bound)
        b = jax.random.uniform(kb, (1, fan_out), jnp.float32, -bound, bound)
        return w, b

    w1, b1 = linear(ks[0], ks[1], IN_FEATURES, HIDDEN)
    w2, b2 = linear(ks[2], ks[3], HIDDEN, HIDDEN)
    w3, b3 = linear(ks[4], ks[5], HIDDEN, NUM_ACTIONS)

    w3p = jnp.zeros((HIDDEN, LANE), jnp.float32).at[:, :NUM_ACTIONS].set(w3)
    b3p = jnp.full((1, LANE), -1e30, jnp.float32).at[:, :NUM_ACTIONS].set(b3)

    return (w1.astype(jnp.bfloat16), b1,
            w2.astype(jnp.bfloat16), b2,
            w3p.astype(jnp.bfloat16), b3p)


def ref_logits(x, params):
    """Pure-JAX reference with the same dtypes as the kernel; returns flattened logits."""
    w1, b1, w2, b2, w3p, b3p = params
    x = x.reshape(x.shape[0], -1)
    h1 = jnp.tanh(jnp.dot(x.astype(jnp.bfloat16), w1,
                          preferred_element_type=jnp.float32) + b1)
    h2 = jnp.tanh(jnp.dot(h1.astype(jnp.bfloat16), w2,
                          preferred_element_type=jnp.float32) + b2)
    logits = jnp.dot(h2.astype(jnp.bfloat16), w3p[:, :NUM_ACTIONS],
                     preferred_element_type=jnp.float32) + b3p[:, :NUM_ACTIONS]
    return logits.reshape(-1)


if __name__ == "__main__":
    key = jax.random.PRNGKey(0)
    k_params, k_x = jax.random.split(key)

    B = 2
    x = jax.random.normal(k_x, (B, IN_FEATURES), dtype=jnp.float32)
    params = init_params(k_params)

    result = jax.block_until_ready(net_forward(x, params))

    logits = jax.block_until_ready(ref_logits(x, params))
    ref_idx = int(jnp.argmax(logits))
    res = int(result)
    # Exact index match expected; tolerance fallback guards against sub-ulp tanh
    # implementation differences between Mosaic and XLA near argmax ties.
    ok = (res == ref_idx) or (float(logits[res]) >= float(jnp.max(logits)) - 1e-2)
    assert ok, f"mismatch: pallas={res} ref={ref_idx}"

    print("KERNEL_OK")
</pallas_src>

<mosaic_0001>
module attributes {stable_mosaic.version = 11 : i64} {
  func.func @mlp_tile_argmax_kernel(%arg0: i32, %arg1: memref<8x231xf32, #tpu.memory_space<vmem>>, %arg2: memref<231x64xbf16, #tpu.memory_space<vmem>>, %arg3: memref<1x64xf32, #tpu.memory_space<vmem>>, %arg4: memref<64x64xbf16, #tpu.memory_space<vmem>>, %arg5: memref<1x64xf32, #tpu.memory_space<vmem>>, %arg6: memref<64x128xbf16, #tpu.memory_space<vmem>>, %arg7: memref<1x128xf32, #tpu.memory_space<vmem>>, %arg8: memref<1x1xf32, #tpu.memory_space<smem>>, %arg9: memref<1x1xi32, #tpu.memory_space<smem>>, %arg10: memref<1x1xf32, #tpu.memory_space<vmem>>, %arg11: memref<1x1xi32, #tpu.memory_space<vmem>>) attributes {dimension_semantics = [#tpu.dimension_semantics<parallel>], iteration_bounds = array<i64: 1>, scalar_prefetch = 0 : i64, scratch_operands = 2 : i64, tpu.core_type = #tpu.core_type<tc>, window_params = [{transform_indices = @transform_0, window_bounds = array<i64: 8, 231>}, {pipeline_mode = #tpu.pipeline_mode<synchronous>, transform_indices = @transform_1, window_bounds = array<i64: 231, 64>}, {pipeline_mode = #tpu.pipeline_mode<synchronous>, transform_indices = @transform_2, window_bounds = array<i64: 1, 64>}, {pipeline_mode = #tpu.pipeline_mode<synchronous>, transform_indices = @transform_3, window_bounds = array<i64: 64, 64>}, {pipeline_mode = #tpu.pipeline_mode<synchronous>, transform_indices = @transform_4, window_bounds = array<i64: 1, 64>}, {pipeline_mode = #tpu.pipeline_mode<synchronous>, transform_indices = @transform_5, window_bounds = array<i64: 64, 128>}, {pipeline_mode = #tpu.pipeline_mode<synchronous>, transform_indices = @transform_6, window_bounds = array<i64: 1, 128>}, {transform_indices = @transform_7, window_bounds = array<i64: 1, 1>}, {transform_indices = @transform_8, window_bounds = array<i64: 1, 1>}]} {
    %c0 = arith.constant 0 : index
    %c0_0 = arith.constant 0 : index
    %0 = vector.load %arg1[%c0, %c0_0] : memref<8x231xf32, #tpu.memory_space<vmem>>, vector<8x231xf32>
    %1 = arith.truncf %0 : vector<8x231xf32> to vector<8x231xbf16>
    %c0_1 = arith.constant 0 : index
    %c0_2 = arith.constant 0 : index
    %2 = vector.load %arg2[%c0_1, %c0_2] : memref<231x64xbf16, #tpu.memory_space<vmem>>, vector<231x64xbf16>
    %cst = arith.constant dense<0.000000e+00> : vector<8x64xf32>
    %3 = tpu.matmul %1, %2, %cst {dimension_numbers = #tpu.dot_dimension_numbers<[1], [0], [0], [1], [0, 0, 1, 1], [], []>} : vector<8x231xbf16>, vector<231x64xbf16>, vector<8x64xf32> -> vector<8x64xf32>
    %c0_3 = arith.constant 0 : index
    %c0_4 = arith.constant 0 : index
    %4 = vector.load %arg3[%c0_3, %c0_4] : memref<1x64xf32, #tpu.memory_space<vmem>>, vector<1x64xf32>
    %5 = vector.broadcast %4 : vector<1x64xf32> to vector<8x64xf32>
    %6 = arith.addf %3, %5 : vector<8x64xf32>
    %7 = math.tanh %6 : vector<8x64xf32>
    %8 = arith.truncf %7 : vector<8x64xf32> to vector<8x64xbf16>
    %c0_5 = arith.constant 0 : index
    %c0_6 = arith.constant 0 : index
    %9 = vector.load %arg4[%c0_5, %c0_6] : memref<64x64xbf16, #tpu.memory_space<vmem>>, vector<64x64xbf16>
    %cst_7 = arith.constant dense<0.000000e+00> : vector<8x64xf32>
    %10 = tpu.matmul %8, %9, %cst_7 {dimension_numbers = #tpu.dot_dimension_numbers<[1], [0], [0], [1], [0, 0, 1, 1], [], []>} : vector<8x64xbf16>, vector<64x64xbf16>, vector<8x64xf32> -> vector<8x64xf32>
    %c0_8 = arith.constant 0 : index
    %c0_9 = arith.constant 0 : index
    %11 = vector.load %arg5[%c0_8, %c0_9] : memref<1x64xf32, #tpu.memory_space<vmem>>, vector<1x64xf32>
    %12 = vector.broadcast %11 : vector<1x64xf32> to vector<8x64xf32>
    %13 = arith.addf %10, %12 : vector<8x64xf32>
    %14 = math.tanh %13 : vector<8x64xf32>
    %15 = arith.truncf %14 : vector<8x64xf32> to vector<8x64xbf16>
    %c0_10 = arith.constant 0 : index
    %c0_11 = arith.constant 0 : index
    %16 = vector.load %arg6[%c0_10, %c0_11] : memref<64x128xbf16, #tpu.memory_space<vmem>>, vector<64x128xbf16>
    %cst_12 = arith.constant dense<0.000000e+00> : vector<8x128xf32>
    %17 = tpu.matmul %15, %16, %cst_12 {dimension_numbers = #tpu.dot_dimension_numbers<[1], [0], [0], [1], [0, 0, 1, 1], [], []>} : vector<8x64xbf16>, vector<64x128xbf16>, vector<8x128xf32> -> vector<8x128xf32>
    %c0_13 = arith.constant 0 : index
    %c0_14 = arith.constant 0 : index
    %18 = vector.load %arg7[%c0_13, %c0_14] : memref<1x128xf32, #tpu.memory_space<vmem>>, vector<1x128xf32>
    %19 = vector.broadcast %18 : vector<1x128xf32> to vector<8x128xf32>
    %20 = arith.addf %17, %19 : vector<8x128xf32>
    %21 = tpu.iota {dimensions = array<i32: 0>} : vector<8x1xi32>
    %c8_i32 = arith.constant 8 : i32
    %22 = arith.muli %arg0, %c8_i32 : i32
    %23 = vector.broadcast %22 : i32 to vector<8x1xi32>
    %24 = arith.addi %21, %23 : vector<8x1xi32>
    %c2_i32 = arith.constant 2 : i32
    %25 = vector.broadcast %c2_i32 : i32 to vector<8x1xi32>
    %26 = arith.cmpi slt, %24, %25 : vector<8x1xi32>
    %cst_15 = arith.constant -3.000000e+38 : f32
    %27 = vector.shape_cast %26 : vector<8x1xi1> to vector<8x1xi1>
    %28 = vector.broadcast %27 : vector<8x1xi1> to vector<8x128xi1>
    %29 = vector.broadcast %cst_15 : f32 to vector<8x128xf32>
    %30 = arith.select %28, %20, %29 : vector<8x128xi1>, vector<8x128xf32>
    %31 = vector.shape_cast %30 : vector<8x128xf32> to vector<1x8x128xf32>
    %cst_16 = arith.constant dense<0xFF800000> : vector<1xf32>
    %32 = vector.multi_reduction <maximumf>, %31, %cst_16 [1, 2] : vector<1x8x128xf32> to vector<1xf32>
    %33 = vector.shape_cast %32 : vector<1xf32> to vector<1x1x1xf32>
    %34 = vector.extract %33[0, 0, 0] : f32 from vector<1x1x1xf32>
    %35 = vector.broadcast %34 : f32 to vector<1x1xf32>
    %36 = tpu.iota {dimensions = array<i32: 0>} : vector<8x128xi32>
    %37 = tpu.iota {dimensions = array<i32: 1>} : vector<8x128xi32>
    %c4_i32 = arith.constant 4 : i32
    %38 = vector.broadcast %c4_i32 : i32 to vector<8x128xi32>
    %39 = arith.muli %36, %38 : vector<8x128xi32>
    %40 = arith.addi %39, %37 : vector<8x128xi32>
    %41 = vector.broadcast %35 : vector<1x1xf32> to vector<8x128xf32>
    %42 = arith.cmpf oeq, %30, %41 : vector<8x128xf32>
    %c2147483647_i32 = arith.constant 2147483647 : i32
    %43 = vector.broadcast %c2147483647_i32 : i32 to vector<8x128xi32>
    %44 = arith.select %42, %40, %43 : vector<8x128xi1>, vector<8x128xi32>
    %45 = vector.shape_cast %44 : vector<8x128xi32> to vector<1x8x128xi32>
    %cst_17 = arith.constant dense<2147483647> : vector<1xi32>
    %46 = vector.multi_reduction <minsi>, %45, %cst_17 [1, 2] : vector<1x8x128xi32> to vector<1xi32>
    %47 = vector.shape_cast %46 : vector<1xi32> to vector<1x1x1xi32>
    %48 = vector.extract %47[0, 0, 0] : i32 from vector<1x1x1xi32>
    %49 = vector.broadcast %48 : i32 to vector<1x1xi32>
    %c0_18 = arith.constant 0 : index
    %c0_19 = arith.constant 0 : index
    %50 = vector.load %arg10[%c0_18, %c0_19] : memref<1x1xf32, #tpu.memory_space<vmem>>, vector<1x1xf32>
    tpu.vector_store %arg10[%c0_18, %c0_19], %35 {strides = array<i32>} : memref<1x1xf32, #tpu.memory_space<vmem>>, vector<1x1xf32>,
    %c0_20 = arith.constant 0 : index
    %c0_21 = arith.constant 0 : index
    %51 = vector.load %arg11[%c0_20, %c0_21] : memref<1x1xi32, #tpu.memory_space<vmem>>, vector<1x1xi32>
    tpu.vector_store %arg11[%c0_20, %c0_21], %49 {strides = array<i32>} : memref<1x1xi32, #tpu.memory_space<vmem>>, vector<1x1xi32>,
    %c0_22 = arith.constant 0 : index
    %c0_23 = arith.constant 0 : index
    %52 = vector.load %arg10[%c0_22, %c0_23] : memref<1x1xf32, #tpu.memory_space<vmem>>, vector<1x1xf32>
    %53 = vector.extract %52[0, 0] : f32 from vector<1x1xf32>
    %c0_24 = arith.constant 0 : index
    %c0_25 = arith.constant 0 : index
    %54 = memref.load %arg8[%c0_24, %c0_25] : memref<1x1xf32, #tpu.memory_space<smem>>
    memref.store %53, %arg8[%c0_24, %c0_25] : memref<1x1xf32, #tpu.memory_space<smem>>
    %c0_26 = arith.constant 0 : index
    %c0_27 = arith.constant 0 : index
    %55 = vector.load %arg11[%c0_26, %c0_27] : memref<1x1xi32, #tpu.memory_space<vmem>>, vector<1x1xi32>
    %56 = vector.extract %55[0, 0] : i32 from vector<1x1xi32>
    %c8_i32_28 = arith.constant 8 : i32
    %57 = arith.muli %arg0, %c8_i32_28 : i32
    %c4_i32_29 = arith.constant 4 : i32
    %58 = arith.muli %57, %c4_i32_29 : i32
    %59 = arith.addi %56, %58 : i32
    %c0_30 = arith.constant 0 : index
    %c0_31 = arith.constant 0 : index
    %60 = memref.load %arg9[%c0_30, %c0_31] : memref<1x1xi32, #tpu.memory_space<smem>>
    memref.store %59, %arg9[%c0_30, %c0_31] : memref<1x1xi32, #tpu.memory_space<smem>>
    return
  }
  func.func @transform_0(%arg0: i32) -> (i32, i32) {
    %c0_i32 = arith.constant 0 : i32
    %c0_i32_0 = arith.constant 0 : i32
    return %arg0, %c0_i32 : i32, i32
  }
  func.func @transform_1(%arg0: i32) -> (i32, i32) {
    %c0_i32 = arith.constant 0 : i32
    %c0_i32_0 = arith.constant 0 : i32
    %c0_i32_1 = arith.constant 0 : i32
    return %c0_i32, %c0_i32_0 : i32, i32
  }
  func.func @transform_2(%arg0: i32) -> (i32, i32) {
    %c0_i32 = arith.constant 0 : i32
    %c0_i32_0 = arith.constant 0 : i32
    %c0_i32_1 = arith.constant 0 : i32
    return %c0_i32, %c0_i32_0 : i32, i32
  }
  func.func @transform_3(%arg0: i32) -> (i32, i32) {
    %c0_i32 = arith.constant 0 : i32
    %c0_i32_0 = arith.constant 0 : i32
    %c0_i32_1 = arith.constant 0 : i32
    return %c0_i32, %c0_i32_0 : i32, i32
  }
  func.func @transform_4(%arg0: i32) -> (i32, i32) {
    %c0_i32 = arith.constant 0 : i32
    %c0_i32_0 = arith.constant 0 : i32
    %c0_i32_1 = arith.constant 0 : i32
    return %c0_i32, %c0_i32_0 : i32, i32
  }
  func.func @transform_5(%arg0: i32) -> (i32, i32) {
    %c0_i32 = arith.constant 0 : i32
    %c0_i32_0 = arith.constant 0 : i32
    %c0_i32_1 = arith.constant 0 : i32
    return %c0_i32, %c0_i32_0 : i32, i32
  }
  func.func @transform_6(%arg0: i32) -> (i32, i32) {
    %c0_i32 = arith.constant 0 : i32
    %c0_i32_0 = arith.constant 0 : i32
    %c0_i32_1 = arith.constant 0 : i32
    return %c0_i32, %c0_i32_0 : i32, i32
  }
  func.func @transform_7(%arg0: i32) -> (i32, i32) {
    %c0_i32 = arith.constant 0 : i32
    %c0_i32_0 = arith.constant 0 : i32
    return %arg0, %c0_i32 : i32, i32
  }
  func.func @transform_8(%arg0: i32) -> (i32, i32) {
    %c0_i32 = arith.constant 0 : i32
    %c0_i32_0 = arith.constant 0 : i32
    return %arg0, %c0_i32 : i32, i32
  }
}

</mosaic_0001>

<llo_original>
// kernel: net_forward.1
$region0: #{net_forward.1}
  #allocation0 [shape = 'u32[]', space=smem, size = 0x4, offset = 0x4, fixed_abs, tag = 'smem constant byte address 0x4 - core index']
  #allocation1 [shape = 'u32[144,128]{1,0:T(1,128)}', space=vmem, size = 0x12000, scoped, tag = 'internal scratch']
  #allocation2 [shape = 'f32[1,1]{1,0:T(1,128)}', space=vmem, size = 0x200, scoped, tag = 'scratch operand']
  #allocation3 [shape = 's32[1,1]{1,0:T(1,128)}', space=vmem, size = 0x200, scoped, tag = 'scratch operand']
  %s0 = inlined_call_operand.vmem [shape: f32[8,231], index: 0, kind: input, shape index: {}]
  %s1 = inlined_call_operand.vmem [shape: bf16[231,64], index: 1, kind: input, shape index: {}]
  %s2 = inlined_call_operand.vmem [shape: f32[1,64], index: 2, kind: input, shape index: {}]
  %s3 = inlined_call_operand.vmem [shape: bf16[64,64], index: 3, kind: input, shape index: {}]
  %s4 = inlined_call_operand.vmem [shape: f32[1,64], index: 4, kind: input, shape index: {}]
  %s5 = inlined_call_operand.vmem [shape: bf16[64,128], index: 5, kind: input, shape index: {}]
  %s6 = inlined_call_operand.vmem [shape: f32[1,128], index: 6, kind: input, shape index: {}]
  %s7 = inlined_call_operand.hbm [shape: f32[1,1], index: 7, kind: output, shape index: {0}]
  %s8 = inlined_call_operand.hbm [shape: s32[1,1], index: 8, kind: output, shape index: {1}]
  %9 = xla_tuple %s7, %s8
  %s10 = sld [smem:[#allocation0]]
  $region46: #{net_forward.1} parent=0
    _
  %s12 = ssub.s32 1, %s10
  %s13 = scalar_select 0, %s12, %s10
  $region1: #{net_forward.1} parent=0
    #allocation4 [shape = 'u8[512]{0}', space=smem, size = 0x200, scoped, tag = 'output window, operand 0, single buffered']
    #allocation5 [shape = 's32[1]{0}', space=sflag, size = 0x4, scoped, tag = 'scoped memory for net_forward.1']
    #allocation6 [shape = 'u8[512]{0}', space=smem, size = 0x200, scoped, tag = 'output window, operand 1, single buffered']
    #allocation7 [shape = 's32[1]{0}', space=sflag, size = 0x4, scoped, tag = 'scoped memory for net_forward.1']
    %14 = vsyncpa [#allocation5], 0
    %15 = vsyncpa [#allocation7], 0
    // Predicated region
    $region2: #{net_forward.1} parent=1 // pred_check
      _
    $region3: #{net_forward.1} parent=1 // pred_check_branch
      %17 = sbr.rel (0) target = $region5
    $region4: #{net_forward.1} parent=1 // pred_region
      _
    $region5: #{net_forward.1} parent=1 // pred_fallthru
      _
    // Predicated region
    $region6: #{net_forward.1} parent=1 // pred_check
      _
    $region7: #{net_forward.1} parent=1 // pred_check_branch
      %19 = sbr.rel (0) target = $region9
    $region8: #{net_forward.1} parent=1 // pred_region
      _
    $region9: #{net_forward.1} parent=1 // pred_fallthru
      _
    // Predicated region
    $region10: #{net_forward.1} parent=1 // pred_check
      _
    $region11: #{net_forward.1} parent=1 // pred_check_branch
      %21 = sbr.rel (0) target = $region13
    $region12: #{net_forward.1} parent=1 // pred_region
      _
    $region13: #{net_forward.1} parent=1 // pred_fallthru
      _
    // Predicated region
    $region14: #{net_forward.1} parent=1 // pred_check
      _
    $region15: #{net_forward.1} parent=1 // pred_check_branch
      %23 = sbr.rel (0) target = $region17
    $region16: #{net_forward.1} parent=1 // pred_region
      _
    $region17: #{net_forward.1} parent=1 // pred_fallthru
      _
    // Predicated region
    $region18: #{net_forward.1} parent=1 // pred_check
      _
    $region19: #{net_forward.1} parent=1 // pred_check_branch
      %25 = sbr.rel (0) target = $region21
    $region20: #{net_forward.1} parent=1 // pred_region
      _
    $region21: #{net_forward.1} parent=1 // pred_fallthru
      _
    // Predicated region
    $region22: #{net_forward.1} parent=1 // pred_check
      _
    $region23: #{net_forward.1} parent=1 // pred_check_branch
      %27 = sbr.rel (0) target = $region25
    $region24: #{net_forward.1} parent=1 // pred_region
      _
    $region25: #{net_forward.1} parent=1 // pred_fallthru
      _
    // Predicated region
    $region26: #{net_forward.1} parent=1 // pred_check
      _
    $region27: #{net_forward.1} parent=1 // pred_check_branch
      %29 = sbr.rel (0) target = $region29
    $region28: #{net_forward.1} parent=1 // pred_region
      _
    $region29: #{net_forward.1} parent=1 // pred_fallthru
      _
    %v31 = vld [vmem:[%s0] sm:$0xff]
    %v32 = vld [vmem:[%s0 + $0x8] sm:$0xff]
    %v33 = vpack.c.bf16 %v31, %v31
    %v34 = vpack.c.bf16 %v32, %v32
    %v35 = vld [vmem:[%s1] sm:$0xf]
    %v36 = vld [vmem:[%s1 + $0x4] sm:$0xf]
    %v37 = vld [vmem:[%s1 + $0x8] sm:$0xf]
    %v38 = vld [vmem:[%s1 + $0xc] sm:$0xf]
    %v39 = vld [vmem:[%s1 + $0x10] sm:$0xf]
    %v40 = vld [vmem:[%s1 + $0x14] sm:$0xf]
    %v41 = vld [vmem:[%s1 + $0x18] sm:$0xf]
    %v42 = vld [vmem:[%s1 + $0x1c] sm:$0xf]
    %v43 = vld [vmem:[%s1 + $0x20] sm:$0xf]
    %v44 = vld [vmem:[%s1 + $0x24] sm:$0xf]
    %v45 = vld [vmem:[%s1 + $0x28] sm:$0xf]
    %v46 = vld [vmem:[%s1 + $0x2c] sm:$0xf]
    %v47 = vld [vmem:[%s1 + $0x30] sm:$0xf]
    %v48 = vld [vmem:[%s1 + $0x34] sm:$0xf]
    %v49 = vld [vmem:[%s1 + $0x38] sm:$0xf]
    %v50 = vld [vmem:[%s1 + $0x3c] sm:$0xf]
    %v51 = vld [vmem:[%s1 + $0x40] sm:$0xf]
    %v52 = vld [vmem:[%s1 + $0x44] sm:$0xf]
    %v53 = vld [vmem:[%s1 + $0x48] sm:$0xf]
    %v54 = vld [vmem:[%s1 + $0x4c] sm:$0xf]
    %v55 = vld [vmem:[%s1 + $0x50] sm:$0xf]
    %v56 = vld [vmem:[%s1 + $0x54] sm:$0xf]
    %v57 = vld [vmem:[%s1 + $0x58] sm:$0xf]
    %v58 = vld [vmem:[%s1 + $0x5c] sm:$0xf]
    %v59 = vld [vmem:[%s1 + $0x60] sm:$0xf]
    %v60 = vld [vmem:[%s1 + $0x64] sm:$0xf]
    %v61 = vld [vmem:[%s1 + $0x68] sm:$0xf]
    %v62 = vld [vmem:[%s1 + $0x6c] sm:$0xf]
    %v63 = vld [vmem:[%s1 + $0x70] sm:$0xf]
    %v64 = vld [vmem:[%s2] sm:$0x1]
    %v66 = vlaneseq
    %v67 = vshrl.u32 %v66, 7
    %v68 = vsub.s32 0, %v67
    %v69 = vrot.slane %v64, %v68
    %v100 = vunpack.c.l.b16 %v35
    %v101 = vunpack.c.l.b16 %v36
    %v102 = vunpack.c.l.b16 %v37
    %v103 = vunpack.c.l.b16 %v38
    %v104 = vunpack.c.l.b16 %v39
    %v105 = vunpack.c.l.b16 %v40
    %v106 = vunpack.c.l.b16 %v41
    %v107 = vunpack.c.l.b16 %v42
    %v108 = vunpack.c.l.b16 %v43
    %v109 = vunpack.c.l.b16 %v44
    %v110 = vunpack.c.l.b16 %v45
    %v111 = vunpack.c.l.b16 %v46
    %v112 = vunpack.c.l.b16 %v47
    %v113 = vunpack.c.l.b16 %v48
    %v114 = vunpack.c.l.b16 %v49
    %v115 = vunpack.c.l.b16 %v50
    %v116 = vunpack.c.l.b16 %v51
    %v117 = vunpack.c.l.b16 %v52
    %v118 = vunpack.c.l.b16 %v53
    %v119 = vunpack.c.l.b16 %v54
    %v120 = vunpack.c.l.b16 %v55
    %v121 = vunpack.c.l.b16 %v56
    %v122 = vunpack.c.l.b16 %v57
    %v123 = vunpack.c.l.b16 %v58
    %v124 = vunpack.c.l.b16 %v59
    %v125 = vunpack.c.l.b16 %v60
    %v126 = vunpack.c.l.b16 %v61
    %v127 = vunpack.c.l.b16 %v62
    %v128 = vunpack.c.l.b16 %v63
    %v129 = vpack.c.b16 %v101, %v100
    %v130 = vpack.c.b16 %v103, %v102
    %v131 = vpack.c.b16 %v105, %v104
    %v132 = vpack.c.b16 %v107, %v106
    %v133 = vpack.c.b16 %v109, %v108
    %v134 = vpack.c.b16 %v111, %v110
    %v135 = vpack.c.b16 %v113, %v112
    %v136 = vpack.c.b16 %v115, %v114
    %v137 = vpack.c.b16 %v117, %v116
    %v138 = vpack.c.b16 %v119, %v118
    %v139 = vpack.c.b16 %v121, %v120
    %v140 = vpack.c.b16 %v123, %v122
    %v141 = vpack.c.b16 %v125, %v124
    %v142 = vpack.c.b16 %v127, %v126
    %v143 = vpack.c.b16 %v128, %v128
    %vm158 = vcmask 842752
    %v160 = vsel %vm158, %v34, 0
    %vm162 = vcmask 1042432
    %vm163 = vcmask 1043456
    %v164 = vsel %vm162, 4294967295, 65535
    %v165 = vsel %vm163, %v164, 0
    %v167 = vand.u32 %v143, %v165
    %169 = vmatprep.subr.bf16.mxu0 0
    %170 = vmatpush1.bf16.msra.mxu0 %v129
    %171 = vmatprep.subr.bf16.mxu0 0
    %172 = vmatpush1.bf16.msra.mxu0 %v130
    %173 = vmatprep.subr.bf16.mxu0 0
    %174 = vmatpush1.bf16.msra.mxu0 %v131
    %175 = vmatprep.subr.bf16.mxu0 0
    %176 = vmatpush1.bf16.msra.mxu0 %v132
    %177 = vmatprep.subr.bf16.mxu0 0
    %178 = vmatpush1.bf16.msra.mxu0 %v133
    %179 = vmatprep.subr.bf16.mxu0 0
    %180 = vmatpush1.bf16.msra.mxu0 %v134
    %181 = vmatprep.subr.bf16.mxu0 0
    %182 = vmatpush1.bf16.msra.mxu0 %v135
    %183 = vmatprep.subr.bf16.mxu0 0
    %184 = vmatpush1.bf16.msra.mxu0 %v136
    %185 = vmatprep.subr.bf16.mxu0 0
    %186 = vmatpush1.bf16.msra.mxu0 %v137
    %187 = vmatprep.subr.bf16.mxu0 0
    %188 = vmatpush1.bf16.msra.mxu0 %v138
    %189 = vmatprep.subr.bf16.mxu0 0
    %190 = vmatpush1.bf16.msra.mxu0 %v139
    %191 = vmatprep.subr.bf16.mxu0 0
    %192 = vmatpush1.bf16.msra.mxu0 %v140
    %193 = vmatprep.subr.bf16.mxu0 0
    %194 = vmatpush1.bf16.msra.mxu0 %v141
    %195 = vmatprep.subr.bf16.mxu0 0
    %196 = vmatpush1.bf16.msra.mxu0 %v142
    %197 = vmatprep.subr.bf16.mxu0 0
    %198 = vmatpush1.bf16.msra.mxu0 %v167
    %199 = vmatprep.subr.bf16.mxu0 0
    %200 = vmatpush1.bf16.msra.mxu0 0
    %201 = vmatprep.mubr.bf16.mxu0 %v160
    %202 = vmatmul.mubr.bf16.gmra.mrb[0].mxu0 %v33
    %v203 = vpop.f32.mrb[0].mxu0
    %v204 = vadd.f32 %v69, %v203
    %v205 = vpop.f32.mrb[0].mxu0
    %v206 = vpop.f32.mrb[0].mxu0
    %v207 = vpop.f32.mrb[0].mxu0
    %208 = vdwg.mxu0
    %v209 = vtanh.pop %v204
    %v210 = vpack.c.bf16 %v209, %v209
    %v211 = vld [vmem:[%s3] sm:$0xf]
    %v212 = vld [vmem:[%s3 + $0x4] sm:$0xf]
    %v213 = vld [vmem:[%s3 + $0x8] sm:$0xf]
    %v214 = vld [vmem:[%s3 + $0xc] sm:$0xf]
    %v215 = vld [vmem:[%s3 + $0x10] sm:$0xf]
    %v216 = vld [vmem:[%s3 + $0x14] sm:$0xf]
    %v217 = vld [vmem:[%s3 + $0x18] sm:$0xf]
    %v218 = vld [vmem:[%s3 + $0x1c] sm:$0xf]
    %v219 = vld [vmem:[%s4] sm:$0x1]
    %v221 = vlaneseq
    %v222 = vshrl.u32 %v221, 7
    %v223 = vsub.s32 0, %v222
    %v224 = vrot.slane %v219, %v223
    %v234 = vunpack.c.l.b16 %v211
    %v235 = vunpack.c.l.b16 %v212
    %v236 = vunpack.c.l.b16 %v213
    %v237 = vunpack.c.l.b16 %v214
    %v238 = vunpack.c.l.b16 %v215
    %v239 = vunpack.c.l.b16 %v216
    %v240 = vunpack.c.l.b16 %v217
    %v241 = vunpack.c.l.b16 %v218
    %v242 = vpack.c.b16 %v235, %v234
    %v243 = vpack.c.b16 %v237, %v236
    %v244 = vpack.c.b16 %v239, %v238
    %v245 = vpack.c.b16 %v241, %v240
    %vm250 = vcmask 523264
    %v252 = vsel %vm250, %v210, 0
    %254 = vmatprep.subr.bf16.mxu0 0
    %255 = vmatpush1.bf16.msra.mxu0 %v242
    %256 = vmatprep.subr.bf16.mxu0 0
    %257 = vmatpush1.bf16.msra.mxu0 %v243
    %258 = vmatprep.subr.bf16.mxu0 0
    %259 = vmatpush1.bf16.msra.mxu0 %v244
    %260 = vmatprep.subr.bf16.mxu0 0
    %261 = vmatpush1.bf16.msra.mxu0 %v245
    %262 = vmatprep.subr.bf16.mxu0 0
    %263 = vmatpush1.bf16.msra.mxu0 0
    %264 = vmatprep.subr.bf16.mxu0 0
    %265 = vmatpush1.bf16.msra.mxu0 0
    %266 = vmatprep.subr.bf16.mxu0 0
    %267 = vmatpush1.bf16.msra.mxu0 0
    %268 = vmatprep.subr.bf16.mxu0 0
    %269 = vmatpush1.bf16.msra.mxu0 0
    %270 = vmatprep.subr.bf16.mxu0 0
    %271 = vmatpush1.bf16.msra.mxu0 0
    %272 = vmatprep.subr.bf16.mxu0 0
    %273 = vmatpush1.bf16.msra.mxu0 0
    %274 = vmatprep.subr.bf16.mxu0 0
    %275 = vmatpush1.bf16.msra.mxu0 0
    %276 = vmatprep.subr.bf16.mxu0 0
    %277 = vmatpush1.bf16.msra.mxu0 0
    %278 = vmatprep.subr.bf16.mxu0 0
    %279 = vmatpush1.bf16.msra.mxu0 0
    %280 = vmatprep.subr.bf16.mxu0 0
    %281 = vmatpush1.bf16.msra.mxu0 0
    %282 = vmatprep.subr.bf16.mxu0 0
    %283 = vmatpush1.bf16.msra.mxu0 0
    %284 = vmatprep.subr.bf16.mxu0 0
    %285 = vmatpush1.bf16.msra.mxu0 0
    %286 = vmatprep.mubr.bf16.mxu0 0
    %287 = vmatmul.mubr.bf16.gmra.mrb[0].mxu0 %v252
    %v288 = vpop.f32.mrb[0].mxu0
    %v289 = vadd.f32 %v224, %v288
    %v290 = vpop.f32.mrb[0].mxu0
    %v291 = vpop.f32.mrb[0].mxu0
    %v292 = vpop.f32.mrb[0].mxu0
    %293 = vdwg.mxu0
    %v294 = vtanh.pop %v289
    %v295 = vpack.c.bf16 %v294, %v294
    %v296 = vld [vmem:[%s5] sm:$0xf]
    %v297 = vld [vmem:[%s5 + $0x4] sm:$0xf]
    %v298 = vld [vmem:[%s5 + $0x8] sm:$0xf]
    %v299 = vld [vmem:[%s5 + $0xc] sm:$0xf]
    %v300 = vld [vmem:[%s5 + $0x10] sm:$0xf]
    %v301 = vld [vmem:[%s5 + $0x14] sm:$0xf]
    %v302 = vld [vmem:[%s5 + $0x18] sm:$0xf]
    %v303 = vld [vmem:[%s5 + $0x1c] sm:$0xf]
    %v304 = vld [vmem:[%s6] sm:$0x1]
    %v306 = vlaneseq
    %v307 = vshrl.u32 %v306, 7
    %v308 = vsub.s32 0, %v307
    %v309 = vrot.slane %v304, %v308
    %v319 = vunpack.c.l.b16 %v296
    %v320 = vunpack.c.l.b16 %v297
    %v321 = vunpack.c.l.b16 %v298
    %v322 = vunpack.c.l.b16 %v299
    %v323 = vunpack.c.l.b16 %v300
    %v324 = vunpack.c.l.b16 %v301
    %v325 = vunpack.c.l.b16 %v302
    %v326 = vunpack.c.l.b16 %v303
    %v327 = vpack.c.b16 %v320, %v319
    %v328 = vpack.c.b16 %v322, %v321
    %v329 = vpack.c.b16 %v324, %v323
    %v330 = vpack.c.b16 %v326, %v325
    %v336 = vsel %vm250, %v295, 0
    %338 = vmatprep.subr.bf16.mxu0 0
    %339 = vmatpush1.bf16.msra.mxu0 %v327
    %340 = vmatprep.subr.bf16.mxu0 0
    %341 = vmatpush1.bf16.msra.mxu0 %v328
    %342 = vmatprep.subr.bf16.mxu0 0
    %343 = vmatpush1.bf16.msra.mxu0 %v329
    %344 = vmatprep.subr.bf16.mxu0 0
    %345 = vmatpush1.bf16.msra.mxu0 %v330
    %346 = vmatprep.subr.bf16.mxu0 0
    %347 = vmatpush1.bf16.msra.mxu0 0
    %348 = vmatprep.subr.bf16.mxu0 0
    %349 = vmatpush1.bf16.msra.mxu0 0
    %350 = vmatprep.subr.bf16.mxu0 0
    %351 = vmatpush1.bf16.msra.mxu0 0
    %352 = vmatprep.subr.bf16.mxu0 0
    %353 = vmatpush1.bf16.msra.mxu0 0
    %354 = vmatprep.subr.bf16.mxu0 0
    %355 = vmatpush1.bf16.msra.mxu0 0
    %356 = vmatprep.subr.bf16.mxu0 0
    %357 = vmatpush1.bf16.msra.mxu0 0
    %358 = vmatprep.subr.bf16.mxu0 0
    %359 = vmatpush1.bf16.msra.mxu0 0
    %360 = vmatprep.subr.bf16.mxu0 0
    %361 = vmatpush1.bf16.msra.mxu0 0
    %362 = vmatprep.subr.bf16.mxu0 0
    %363 = vmatpush1.bf16.msra.mxu0 0
    %364 = vmatprep.subr.bf16.mxu0 0
    %365 = vmatpush1.bf16.msra.mxu0 0
    %366 = vmatprep.subr.bf16.mxu0 0
    %367 = vmatpush1.bf16.msra.mxu0 0
    %368 = vmatprep.subr.bf16.mxu0 0
    %369 = vmatpush1.bf16.msra.mxu0 0
    %370 = vmatprep.mubr.bf16.mxu0 0
    %371 = vmatmul.mubr.bf16.gmra.mrb[0].mxu0 %v336
    %v372 = vpop.f32.mrb[0].mxu0
    %v373 = vadd.f32 %v309, %v372
    %v374 = vpop.f32.mrb[0].mxu0
    %v375 = vpop.f32.mrb[0].mxu0
    %v376 = vpop.f32.mrb[0].mxu0
    %377 = vdwg.mxu0
    %v378 = vlaneseq
    %v379 = vshrl.u32 %v378, 7
    %s380 = smul.u32 0, 8
    %v381 = vstv %s380
    %v382 = vadd.s32 %v379, %v381
    %vm383 = vcmp.lt.s32.totalorder %v382, 2
    %v384 = vsel %vm383, 1, 0
    %vm385 = vcmp.eq.s32.totalorder %v384, 1
    %v386 = vsel %vm385, %v373, -3e+38
    %387 = vmax.xlane.f32.xlu0 %v386
    %v388 = vpop.xlane.xlu0 %387
    %v389 = vrot.slane %v388, 4
    %v390 = vmax.f32 %v388, %v389
    %v391 = vrot.slane %v390, 2
    %v392 = vmax.f32 %v390, %v391
    %v393 = vrot.slane %v392, 1
    %v394 = vmax.f32 %v392, %v393
    %s395 = vtos %v394
    %v396 = vstv %s395
    %v397 = vlaneseq
    %v398 = vand.u32 %v397, 127
    %v399 = vmul.u32 %v379, 4
    %v400 = vadd.s32 %v399, %v398
    %vm401 = vcmp.eq.f32.partialorder %v386, %v396
    %v402 = vsel %vm401, %v400, 2147483647
    %v403 = vand.u32 %v402, 65535
    %v404 = vshra.s32 %v402, 16
    %v405 = vcvt.s32.f32 %v403
    %v406 = vcvt.s32.f32 %v404
    %407 = vmin.xlane.f32.xlu0 %v406
    %v408 = vpop.xlane.xlu0 %407
    %vm409 = vcmp.eq.f32.partialorder %v406, %v408
    %v410 = vsel %vm409, %v405, inf
    %411 = vmin.xlane.f32.xlu0 %v410
    %v412 = vpop.xlane.xlu0 %411
    %v413 = vcvt.f32.s32 %v412
    %v414 = vcvt.f32.s32 %v408
    %v415 = vshll.u32 %v414, 16
    %v416 = vadd.s32 %v415, %v413
    %v417 = vrot.slane %v416, 4
    %vm418 = vcmp.lt.s32.totalorder %v416, %v417
    %v419 = vsel %vm418, %v416, %v417
    %v420 = vrot.slane %v419, 2
    %vm421 = vcmp.lt.s32.totalorder %v419, %v420
    %v422 = vsel %vm421, %v419, %v420
    %v423 = vrot.slane %v422, 1
    %vm424 = vcmp.lt.s32.totalorder %v422, %v423
    %v425 = vsel %vm424, %v422, %v423
    %s426 = vtos %v425
    %v427 = vstv %s426
    %vm428 = vcmask 0
    %429 = vst.msk [vmem:[#allocation2] sm:$0x1] %vm428, %v396
    %430 = vst.msk [vmem:[#allocation3] sm:$0x1] %vm428, %v427
    %v431 = vld [vmem:[#allocation2] sm:$0x1]
    %s432 = vtos %v431
    %s433 = scalar_lea.smem [#allocation4], 0
    %434 = sst [smem:[%s433]] %s432
    %v435 = vld [vmem:[#allocation3] sm:$0x1]
    %s436 = vtos %v435
    %s437 = smul.u32 0, 32
    %s438 = sadd.s32 %s436, %s437
    %s439 = scalar_lea.smem [#allocation6], 0
    %440 = sst [smem:[%s439]] %s438
    // Predicated region
    $region30: #{net_forward.1} parent=1 // pred_check
      _
    $region31: #{net_forward.1} parent=1 // pred_check_branch
      %442 = sbr.rel (0) target = $region33
    $region32: #{net_forward.1} parent=1 // pred_region
      %s444 = ssub.s32 16, 16
      %445 = vsyncadd [#allocation5], %s444
      %448 = dma.smem_to_hbm [#allocation4], 16, %s7, [#allocation5]
    $region33: #{net_forward.1} parent=1 // pred_fallthru
      _
    // Predicated region
    $region34: #{net_forward.1} parent=1 // pred_check
      _
    $region35: #{net_forward.1} parent=1 // pred_check_branch
      %450 = sbr.rel (0) target = $region37
    $region36: #{net_forward.1} parent=1 // pred_region
      %s452 = ssub.s32 16, 16
      %453 = vsyncadd [#allocation7], %s452
      %456 = dma.smem_to_hbm [#allocation6], 16, %s8, [#allocation7]
    $region37: #{net_forward.1} parent=1 // pred_fallthru
      _
    // Predicated region
    $region38: #{net_forward.1} parent=1 // pred_check
      _
    $region39: #{net_forward.1} parent=1 // pred_check_branch
      %458 = sbr.rel (0) target = $region41
    $region40: #{net_forward.1} parent=1 // pred_region
      %459 = dma.done [#allocation5], 16
    $region41: #{net_forward.1} parent=1 // pred_fallthru
      _
    // Predicated region
    $region42: #{net_forward.1} parent=1 // pred_check
      _
    $region43: #{net_forward.1} parent=1 // pred_check_branch
      %461 = sbr.rel (0) target = $region45
    $region44: #{net_forward.1} parent=1 // pred_region
      %462 = dma.done [#allocation7], 16
    $region45: #{net_forward.1} parent=1 // pred_fallthru
      _
    %463 = sfence
    %464 = vsyncpa [#allocation5], 1
    %465 = vsyncpa [#allocation7], 1

</llo_original>
